<compile_context>
chip_gen: v7x
topology: tpu7x:2x2x1
jax: 0.10.0
libtpu: 0.0.40
codegen_flags: <defaults>
</compile_context>

<pallas_src>
import functools

import numpy as np
import jax
import jax.numpy as jnp
from jax import lax
from jax.experimental import pallas as pl
from jax.experimental.pallas import tpu as pltpu


def _fps_kernel(xyzf_ref, xyz_smem_ref, ctr_ref, *, G, N, NL):
    """Furthest point sampling for one batch element.

    xyzf_ref     : [1, 24, NL] f32 VMEM  (rows 0:8/8:16/16:24 = x/y/z folded;
                                          point p lives at (p // NL, p % NL))
    xyz_smem_ref : [B*3*N]     f32 SMEM  (flat row-major [B,3,N] copy used for
                                          O(1) scalar reads of selected points)
    ctr_ref      : [1, 3, G]   f32 VMEM  (centers, lane-dense: G on lanes)
    """
    b = pl.program_id(0)
    base = b * (3 * N)

    xf = xyzf_ref[0]                                   # [24, NL]
    x0 = xf[0:8, :]                                    # [8, NL]
    x1 = xf[8:16, :]
    x2 = xf[16:24, :]

    # global point index of every (sublane, lane) slot of the fold
    gidx = (lax.broadcasted_iota(jnp.int32, (8, NL), 0) * NL
            + lax.broadcasted_iota(jnp.int32, (8, NL), 1))

    idx_bits = max(int(N - 1).bit_length(), 1)
    low_mask = (1 << idx_bits) - 1
    neg = jnp.int32(-(2 ** 31))
    padded = (8 * NL) != N

    lane_g = lax.broadcasted_iota(jnp.int32, (1, G), 1)

    def read_point(sel):
        # O(1) scalar-unit reads; removes the masked [3,N] XLU reduce that
        # previously sat on every iteration of the serial FPS chain.
        px = xyz_smem_ref[base + sel]
        py = xyz_smem_ref[base + N + sel]
        pz = xyz_smem_ref[base + 2 * N + sel]
        return px, py, pz

    # pointnet2 semantics: the first sample is point 0.
    p0x, p0y, p0z = read_point(0)
    a0 = jnp.where(lane_g == 0, p0x, 0.0)
    a1 = jnp.where(lane_g == 0, p0y, 0.0)
    a2 = jnp.where(lane_g == 0, p0z, 0.0)
    dist0 = jnp.full((8, NL), 1e10, dtype=jnp.float32)

    def body(g, carry):
        lx, ly, lz, dist, a0, a1, a2 = carry
        # distance of every point to the last selected point: pure VPU work.
        d = (x0 - lx) ** 2 + (x1 - ly) ** 2 + (x2 - lz) ** 2
        dist = jnp.minimum(dist, d)
        # fused value+arg max: order-preserving int view of the non-negative
        # distance with the point index packed into the low bits.  Ties among
        # quantized-equal distances break toward the larger index (benign).
        key = (pltpu.bitcast(dist, jnp.int32) & ~low_mask) | gidx
        if padded:
            key = jnp.where(gidx < N, key, neg)
        sel = jnp.max(key) & low_mask
        lx, ly, lz = read_point(sel)
        hit = lane_g == g
        a0 = jnp.where(hit, lx, a0)
        a1 = jnp.where(hit, ly, a1)
        a2 = jnp.where(hit, lz, a2)
        return lx, ly, lz, dist, a0, a1, a2

    _, _, _, _, a0, a1, a2 = lax.fori_loop(
        1, G, body, (p0x, p0y, p0z, dist0, a0, a1, a2))

    # three full-lane rows, concatenated along sublanes -> unmasked store.
    ctr_ref[0] = jnp.concatenate([a0, a1, a2], axis=0)          # [3, G]


def _knn_kernel(xyz_ref, ctr_ref, idx_ref, *, K, N, TG):
    """Brute-force K nearest points for one (batch, center-tile).

    xyz_ref : [1, N, 3]  f32 VMEM (points on sublanes)
    ctr_ref : [1, 3, TG] f32 VMEM (this tile's centers, lane-dense)
    idx_ref : [1, K, TG] i32 VMEM (output, lane-dense: centers on lanes)
    """
    xyz = xyz_ref[0]                                   # [N, 3]
    x0 = xyz[:, 0:1]                                   # [N, 1]
    x1 = xyz[:, 1:2]
    x2 = xyz[:, 2:3]
    ctr = ctr_ref[0]                                   # [3, TG]
    c0 = ctr[0:1, :]                                   # [1, TG]
    c1 = ctr[1:2, :]
    c2 = ctr[2:3, :]

    # exact squared distances, points on sublanes, centers on lanes
    d = (x0 - c0) ** 2 + (x1 - c1) ** 2 + (x2 - c2) ** 2        # [N, TG]

    idx_bits = max(int(N - 1).bit_length(), 1)
    low_mask = (1 << idx_bits) - 1
    big = jnp.int32(2 ** 31 - 1)

    row_ids = lax.broadcasted_iota(jnp.int32, (N, TG), 0)
    # packed key: one reduction yields both the min value and its argument.
    key0 = (pltpu.bitcast(d, jnp.int32) & ~low_mask) | row_ids
    rowK = lax.broadcasted_iota(jnp.int32, (K, TG), 0)

    def body(k, carry):
        key, acc = carry
        best = jnp.min(key, axis=0, keepdims=True)              # [1, TG]
        sel = best & low_mask
        key = jnp.where(row_ids == sel, big, key)
        acc = jnp.where(rowK == k, sel, acc)                    # row k of [K,TG]
        return key, acc

    _, acc = lax.fori_loop(0, K, body,
                           (key0, jnp.zeros((K, TG), jnp.int32)))
    idx_ref[0] = acc                                            # lane-dense store


def _fps_centers(coords_t, num_group):
    """coords_t: [B, 3, N] f32 -> FPS centers [B, 3, G] f32 (lane-dense)."""
    B, _, N = coords_t.shape
    G = num_group
    NL = -(-N // 8)                       # ceil(N / 8)
    Npad = 8 * NL
    coords_p = coords_t
    if Npad != N:
        coords_p = jnp.pad(coords_t, ((0, 0), (0, 0), (0, Npad - N)))
    coords_folded = coords_p.reshape(B, 24, NL)        # x/y/z folds stacked on sublanes
    # flat SMEM copy for O(1) scalar reads of selected points.
    # TODO(synk): for very large B*N this should become a per-batch blocked
    #             SMEM spec instead of the whole array.
    coords_flat = coords_t.reshape(B * 3 * N)

    kernel = functools.partial(_fps_kernel, G=G, N=N, NL=NL)
    return pl.pallas_call(
        kernel,
        out_shape=jax.ShapeDtypeStruct((B, 3, G), jnp.float32),
        grid=(B,),
        in_specs=[
            pl.BlockSpec((1, 24, NL), lambda b: (b, 0, 0)),
            pl.BlockSpec(memory_space=pltpu.MemorySpace.SMEM),
        ],
        out_specs=pl.BlockSpec((1, 3, G), lambda b: (b, 0, 0)),
        compiler_params=pltpu.CompilerParams(
            dimension_semantics=("parallel",)),
    )(coords_folded, coords_flat)


def _knn_indices(coords, centers_3g, group_size):
    """coords [B,N,3] f32, centers_3g [B,3,G] f32 -> idx [B,G,K] i32."""
    B, N, _ = coords.shape
    G = centers_3g.shape[2]
    K = group_size
    TG = 128 if (G > 128 and G % 128 == 0) else G      # lane-dense center tiles
    GT = G // TG
    kernel = functools.partial(_knn_kernel, K=K, N=N, TG=TG)
    idx_kg = pl.pallas_call(
        kernel,
        out_shape=jax.ShapeDtypeStruct((B, K, G), jnp.int32),
        grid=(B, GT),
        in_specs=[
            pl.BlockSpec((1, N, 3), lambda b, g: (b, 0, 0)),
            pl.BlockSpec((1, 3, TG), lambda b, g: (b, 0, g)),
        ],
        out_specs=pl.BlockSpec((1, K, TG), lambda b, g: (b, 0, g)),
        compiler_params=pltpu.CompilerParams(
            dimension_semantics=("parallel", "parallel")),
    )(coords, centers_3g)
    return jnp.transpose(idx_kg, (0, 2, 1))            # [B, G, K]


@functools.partial(jax.jit, static_argnames=("num_group", "group_size"))
def sparse_group_pallas(coords, feats, *, num_group, group_size):
    """coords [B,N,3] f32, feats [B,N,F] f32 ->
       (neighborhood [B,G,K,3], centers [B,G,3], idx [B,G,K] i32,
        patch_feats [B,G,K,F])."""
    B, N, _ = coords.shape
    F = feats.shape[-1]
    G, K = num_group, group_size

    coords = coords.astype(jnp.float32)
    coords_t = jnp.transpose(coords, (0, 2, 1))        # [B, 3, N]

    centers_3g = _fps_centers(coords_t, G)             # [B, 3, G]  (kernel layout)
    idx = _knn_indices(coords, centers_3g, K)          # [B, G, K]
    centers = jnp.transpose(centers_3g, (0, 2, 1))     # [B, G, 3]  (user layout)

    # O(G*K) gathers + center subtraction stay in XLA so the [N,F] feature
    # block never enters kernel VMEM.
    # TODO(synk): if XLA lowers these gathers to a one-hot matmul for large F,
    #             move them into a small DMA-gather Pallas kernel driven by idx.
    flat = idx.reshape(B, G * K, 1)
    nbr = jnp.take_along_axis(coords, flat, axis=1).reshape(B, G, K, 3)
    nbr = nbr - centers[:, :, None, :]
    pfeat = jnp.take_along_axis(feats.astype(jnp.float32), flat,
                                axis=1).reshape(B, G, K, F)
    return nbr, centers, idx, pfeat


class SparseGroup:
    """JAX/Pallas port of the detection SparseGroup (no learnable params)."""

    def __init__(self, num_group, group_size):
        self.num_group = num_group
        self.group_size = group_size

    def __call__(self, xyz, feature, **kwargs):
        return self.forward(xyz, feature, **kwargs)

    def forward(self, xyz, feature, batch_size=None, points_per_batch=None):
        # xyz: [total_points, 4] with column 0 = batch id, columns 1:4 = coords
        # feature: [total_points, F]
        if batch_size is None or points_per_batch is None:
            # Fallback: host-side batch-id scan (device->host sync). Pass
            # batch_size / points_per_batch explicitly to avoid it in hot loops.
            batch_ids = np.asarray(xyz[:, 0]).astype(np.int64)
            batch_size = int(batch_ids.max()) + 1
            counts = np.bincount(batch_ids, minlength=batch_size)
            # TODO(synk): ragged per-batch point counts would need pad/mask;
            #             this port assumes equal, contiguous segments.
            assert np.all(counts == counts[0]), "equal batch lengths only"
            points_per_batch = int(counts[0])
        B, N = batch_size, points_per_batch

        coords = jnp.asarray(xyz[:, 1:4], dtype=jnp.float32).reshape(B, N, 3)
        feats = jnp.asarray(feature, dtype=jnp.float32).reshape(B, N, -1)

        neighborhoods, centers, batch_idxs, input_features = sparse_group_pallas(
            coords, feats, num_group=self.num_group, group_size=self.group_size)

        batch_xyz = [coords[i:i + 1] for i in range(B)]   # list of [1, N, 3]
        return neighborhoods, centers, batch_idxs, batch_xyz, input_features


if __name__ == "__main__":
    key = jax.random.PRNGKey(0)
    k1, k2 = jax.random.split(key)

    B, N, F = 2, 16, 8
    num_group, group_size = 4, 8

    coords = jax.random.uniform(k1, (B * N, 3), dtype=jnp.float32)
    batch_col = jnp.repeat(jnp.arange(B, dtype=jnp.float32), N)[:, None]
    xyz = jnp.concatenate([batch_col, coords], axis=1)          # [B*N, 4]
    feature = jax.random.normal(k2, (B * N, F), dtype=jnp.float32)

    model = SparseGroup(num_group, group_size)
    neighborhoods, centers, batch_idxs, batch_xyz, input_features = model(
        xyz, feature, batch_size=B, points_per_batch=N)
    jax.block_until_ready((neighborhoods, centers, batch_idxs, input_features))

    # shape checks
    assert neighborhoods.shape == (B, num_group, group_size, 3)
    assert centers.shape == (B, num_group, 3)
    assert batch_idxs.shape == (B, num_group, group_size)
    assert input_features.shape == (B, num_group, group_size, F)

    # light correctness checks: first FPS center is point 0 of each batch, and
    # each center's nearest neighbor is itself (zero center-relative coords).
    coords_b = np.asarray(coords).reshape(B, N, 3)
    np.testing.assert_allclose(np.asarray(centers[:, 0, :]), coords_b[:, 0, :],
                               rtol=0, atol=1e-6)
    np.testing.assert_allclose(np.asarray(neighborhoods[:, :, 0, :]), 0.0,
                               rtol=0, atol=1e-6)

    print("KERNEL_OK")
</pallas_src>

<mosaic_0001>
module attributes {stable_mosaic.version = 11 : i64} {
  func.func @_knn_kernel(%arg0: i32, %arg1: i32, %arg2: memref<1x16x3xf32, #tpu.memory_space<vmem>>, %arg3: memref<1x3x4xf32, #tpu.memory_space<vmem>>, %arg4: memref<1x8x4xi32, #tpu.memory_space<vmem>>) attributes {dimension_semantics = [#tpu.dimension_semantics<parallel>, #tpu.dimension_semantics<parallel>], iteration_bounds = array<i64: 2, 1>, scalar_prefetch = 0 : i64, scratch_operands = 0 : i64, tpu.core_type = #tpu.core_type<tc>, window_params = [{transform_indices = @transform_0, window_bounds = array<i64: 1, 16, 3>}, {transform_indices = @transform_1, window_bounds = array<i64: 1, 3, 4>}, {transform_indices = @transform_2, window_bounds = array<i64: 1, 8, 4>}]} {
    %c0 = arith.constant 0 : index
    %c0_0 = arith.constant 0 : index
    %c0_1 = arith.constant 0 : index
    %0 = vector.load %arg2[%c0, %c0_0, %c0_1] : memref<1x16x3xf32, #tpu.memory_space<vmem>>, vector<1x16x3xf32>
    %1 = vector.shape_cast %0 : vector<1x16x3xf32> to vector<16x3xf32>
    %2 = vector.extract_strided_slice %1 {offsets = [0, 0], sizes = [16, 1], strides = [1, 1]} : vector<16x3xf32> to vector<16x1xf32>
    %3 = vector.extract_strided_slice %1 {offsets = [0, 1], sizes = [16, 1], strides = [1, 1]} : vector<16x3xf32> to vector<16x1xf32>
    %4 = vector.extract_strided_slice %1 {offsets = [0, 2], sizes = [16, 1], strides = [1, 1]} : vector<16x3xf32> to vector<16x1xf32>
    %c0_2 = arith.constant 0 : index
    %c0_3 = arith.constant 0 : index
    %c0_4 = arith.constant 0 : index
    %5 = vector.load %arg3[%c0_2, %c0_3, %c0_4] : memref<1x3x4xf32, #tpu.memory_space<vmem>>, vector<1x3x4xf32>
    %6 = vector.shape_cast %5 : vector<1x3x4xf32> to vector<3x4xf32>
    %7 = vector.extract_strided_slice %6 {offsets = [0, 0], sizes = [1, 4], strides = [1, 1]} : vector<3x4xf32> to vector<1x4xf32>
    %8 = vector.extract_strided_slice %6 {offsets = [1, 0], sizes = [1, 4], strides = [1, 1]} : vector<3x4xf32> to vector<1x4xf32>
    %9 = vector.extract_strided_slice %6 {offsets = [2, 0], sizes = [1, 4], strides = [1, 1]} : vector<3x4xf32> to vector<1x4xf32>
    %10 = vector.broadcast %2 : vector<16x1xf32> to vector<16x4xf32>
    %11 = vector.broadcast %7 : vector<1x4xf32> to vector<16x4xf32>
    %12 = arith.subf %10, %11 : vector<16x4xf32>
    %13 = arith.mulf %12, %12 : vector<16x4xf32>
    %14 = vector.broadcast %3 : vector<16x1xf32> to vector<16x4xf32>
    %15 = vector.broadcast %8 : vector<1x4xf32> to vector<16x4xf32>
    %16 = arith.subf %14, %15 : vector<16x4xf32>
    %17 = arith.mulf %16, %16 : vector<16x4xf32>
    %18 = arith.addf %13, %17 : vector<16x4xf32>
    %19 = vector.broadcast %4 : vector<16x1xf32> to vector<16x4xf32>
    %20 = vector.broadcast %9 : vector<1x4xf32> to vector<16x4xf32>
    %21 = arith.subf %19, %20 : vector<16x4xf32>
    %22 = arith.mulf %21, %21 : vector<16x4xf32>
    %23 = arith.addf %18, %22 : vector<16x4xf32>
    %24 = tpu.iota {dimensions = array<i32: 0>} : vector<16x4xi32>
    %25 = tpu.bitcast %23 : vector<16x4xf32> -> vector<16x4xi32>
    %c-16_i32 = arith.constant -16 : i32
    %26 = vector.broadcast %c-16_i32 : i32 to vector<16x4xi32>
    %27 = arith.andi %25, %26 : vector<16x4xi32>
    %28 = arith.ori %27, %24 : vector<16x4xi32>
    %29 = tpu.iota {dimensions = array<i32: 0>} : vector<8x4xi32>
    %c0_i32 = arith.constant 0 : i32
    %30 = vector.broadcast %c0_i32 : i32 to vector<8x4xi32>
    %c2147483647_i32 = arith.constant 2147483647 : i32
    %c0_i32_5 = arith.constant 0 : i32
    %c8_i32 = arith.constant 8 : i32
    %31 = arith.addi %c0_i32_5, %c8_i32 : i32
    %c1_i32 = arith.constant 1 : i32
    %32:2 = scf.for %arg5 = %c0_i32_5 to %31 step %c1_i32 iter_args(%arg6 = %28, %arg7 = %30) -> (vector<16x4xi32>, vector<8x4xi32>)  : i32 {
      %cst = arith.constant dense<2147483647> : vector<4xi32>
      %36 = vector.multi_reduction <minsi>, %arg6, %cst [0] : vector<16x4xi32> to vector<4xi32>
      %37 = vector.shape_cast %36 : vector<4xi32> to vector<1x4xi32>
      %c15_i32 = arith.constant 15 : i32
      %38 = vector.broadcast %c15_i32 : i32 to vector<1x4xi32>
      %39 = arith.andi %37, %38 : vector<1x4xi32>
      %40 = vector.broadcast %39 : vector<1x4xi32> to vector<16x4xi32>
      %41 = arith.cmpi eq, %24, %40 : vector<16x4xi32>
      %42 = vector.broadcast %c2147483647_i32 : i32 to vector<16x4xi32>
      %43 = arith.select %41, %42, %arg6 : vector<16x4xi1>, vector<16x4xi32>
      %44 = vector.broadcast %arg5 : i32 to vector<8x4xi32>
      %45 = arith.cmpi eq, %29, %44 : vector<8x4xi32>
      %46 = vector.shape_cast %39 : vector<1x4xi32> to vector<1x4xi32>
      %47 = vector.broadcast %46 : vector<1x4xi32> to vector<8x4xi32>
      %48 = arith.select %45, %47, %arg7 : vector<8x4xi1>, vector<8x4xi32>
      scf.yield %43, %48 : vector<16x4xi32>, vector<8x4xi32>
    }
    %c8_i32_6 = arith.constant 8 : i32
    %c0_7 = arith.constant 0 : index
    %c0_8 = arith.constant 0 : index
    %c0_9 = arith.constant 0 : index
    %33 = vector.load %arg4[%c0_7, %c0_8, %c0_9] : memref<1x8x4xi32, #tpu.memory_space<vmem>>, vector<1x8x4xi32>
    %34 = vector.shape_cast %33 : vector<1x8x4xi32> to vector<8x4xi32>
    %35 = vector.shape_cast %32#1 : vector<8x4xi32> to vector<1x8x4xi32>
    tpu.vector_store %arg4[%c0_7, %c0_8, %c0_9], %35 {strides = array<i32>} : memref<1x8x4xi32, #tpu.memory_space<vmem>>, vector<1x8x4xi32>,
    return
  }
  func.func @transform_0(%arg0: i32, %arg1: i32) -> (i32, i32, i32) {
    %c0_i32 = arith.constant 0 : i32
    %c0_i32_0 = arith.constant 0 : i32
    %c0_i32_1 = arith.constant 0 : i32
    return %arg0, %c0_i32, %c0_i32_0 : i32, i32, i32
  }
  func.func @transform_1(%arg0: i32, %arg1: i32) -> (i32, i32, i32) {
    %c0_i32 = arith.constant 0 : i32
    %c0_i32_0 = arith.constant 0 : i32
    return %arg0, %c0_i32, %arg1 : i32, i32, i32
  }
  func.func @transform_2(%arg0: i32, %arg1: i32) -> (i32, i32, i32) {
    %c0_i32 = arith.constant 0 : i32
    %c0_i32_0 = arith.constant 0 : i32
    return %arg0, %c0_i32, %arg1 : i32, i32, i32
  }
}

module attributes {stable_mosaic.version = 11 : i64} {
  func.func @_fps_kernel(%arg0: i32, %arg1: memref<1x24x2xf32, #tpu.memory_space<vmem>>, %arg2: memref<96xf32, #tpu.memory_space<smem>>, %arg3: memref<1x3x4xf32, #tpu.memory_space<vmem>>) attributes {dimension_semantics = [#tpu.dimension_semantics<parallel>], iteration_bounds = array<i64: 2>, scalar_prefetch = 0 : i64, scratch_operands = 0 : i64, tpu.core_type = #tpu.core_type<tc>, window_params = [{transform_indices = @transform_0, window_bounds = array<i64: 1, 24, 2>}, {transform_indices = @transform_1, window_bounds = array<i64: 96>}, {transform_indices = @transform_2, window_bounds = array<i64: 1, 3, 4>}]} {
    %c48_i32 = arith.constant 48 : i32
    %0 = arith.muli %arg0, %c48_i32 : i32
    %c0 = arith.constant 0 : index
    %c0_0 = arith.constant 0 : index
    %c0_1 = arith.constant 0 : index
    %1 = vector.load %arg1[%c0, %c0_0, %c0_1] : memref<1x24x2xf32, #tpu.memory_space<vmem>>, vector<1x24x2xf32>
    %2 = vector.shape_cast %1 : vector<1x24x2xf32> to vector<24x2xf32>
    %3 = vector.extract_strided_slice %2 {offsets = [0, 0], sizes = [8, 2], strides = [1, 1]} : vector<24x2xf32> to vector<8x2xf32>
    %4 = vector.extract_strided_slice %2 {offsets = [8, 0], sizes = [8, 2], strides = [1, 1]} : vector<24x2xf32> to vector<8x2xf32>
    %5 = vector.extract_strided_slice %2 {offsets = [16, 0], sizes = [8, 2], strides = [1, 1]} : vector<24x2xf32> to vector<8x2xf32>
    %6 = tpu.iota {dimensions = array<i32: 0>} : vector<8x2xi32>
    %c2_i32 = arith.constant 2 : i32
    %7 = vector.broadcast %c2_i32 : i32 to vector<8x2xi32>
    %8 = arith.muli %6, %7 : vector<8x2xi32>
    %9 = tpu.iota {dimensions = array<i32: 1>} : vector<8x2xi32>
    %10 = arith.addi %8, %9 : vector<8x2xi32>
    %11 = tpu.iota {dimensions = array<i32: 1>} : vector<1x4xi32>
    %c0_i32 = arith.constant 0 : i32
    %12 = arith.addi %0, %c0_i32 : i32
    %13 = arith.index_cast %12 : i32 to index
    %14 = memref.load %arg2[%13] : memref<96xf32, #tpu.memory_space<smem>>
    %c16_i32 = arith.constant 16 : i32
    %15 = arith.addi %0, %c16_i32 : i32
    %c0_i32_2 = arith.constant 0 : i32
    %16 = arith.addi %15, %c0_i32_2 : i32
    %17 = arith.index_cast %16 : i32 to index
    %18 = memref.load %arg2[%17] : memref<96xf32, #tpu.memory_space<smem>>
    %c32_i32 = arith.constant 32 : i32
    %19 = arith.addi %0, %c32_i32 : i32
    %c0_i32_3 = arith.constant 0 : i32
    %20 = arith.addi %19, %c0_i32_3 : i32
    %21 = arith.index_cast %20 : i32 to index
    %22 = memref.load %arg2[%21] : memref<96xf32, #tpu.memory_space<smem>>
    %c0_i32_4 = arith.constant 0 : i32
    %23 = vector.broadcast %c0_i32_4 : i32 to vector<1x4xi32>
    %24 = arith.cmpi eq, %11, %23 : vector<1x4xi32>
    %cst = arith.constant 0.000000e+00 : f32
    %25 = vector.broadcast %14 : f32 to vector<1x4xf32>
    %26 = vector.broadcast %cst : f32 to vector<1x4xf32>
    %27 = arith.select %24, %25, %26 : vector<1x4xi1>, vector<1x4xf32>
    %c0_i32_5 = arith.constant 0 : i32
    %28 = vector.broadcast %c0_i32_5 : i32 to vector<1x4xi32>
    %29 = arith.cmpi eq, %11, %28 : vector<1x4xi32>
    %cst_6 = arith.constant 0.000000e+00 : f32
    %30 = vector.broadcast %18 : f32 to vector<1x4xf32>
    %31 = vector.broadcast %cst_6 : f32 to vector<1x4xf32>
    %32 = arith.select %29, %30, %31 : vector<1x4xi1>, vector<1x4xf32>
    %c0_i32_7 = arith.constant 0 : i32
    %33 = vector.broadcast %c0_i32_7 : i32 to vector<1x4xi32>
    %34 = arith.cmpi eq, %11, %33 : vector<1x4xi32>
    %cst_8 = arith.constant 0.000000e+00 : f32
    %35 = vector.broadcast %22 : f32 to vector<1x4xf32>
    %36 = vector.broadcast %cst_8 : f32 to vector<1x4xf32>
    %37 = arith.select %34, %35, %36 : vector<1x4xi1>, vector<1x4xf32>
    %cst_9 = arith.constant 1.000000e+10 : f32
    %38 = vector.broadcast %cst_9 : f32 to vector<8x2xf32>
    %c1_i32 = arith.constant 1 : i32
    %c3_i32 = arith.constant 3 : i32
    %39 = arith.addi %c1_i32, %c3_i32 : i32
    %c1_i32_10 = arith.constant 1 : i32
    %40:7 = scf.for %arg4 = %c1_i32 to %39 step %c1_i32_10 iter_args(%arg5 = %14, %arg6 = %18, %arg7 = %22, %arg8 = %38, %arg9 = %27, %arg10 = %32, %arg11 = %37) -> (f32, f32, f32, vector<8x2xf32>, vector<1x4xf32>, vector<1x4xf32>, vector<1x4xf32>)  : i32 {
      %45 = vector.broadcast %arg5 : f32 to vector<8x2xf32>
      %46 = arith.subf %3, %45 : vector<8x2xf32>
      %47 = arith.mulf %46, %46 : vector<8x2xf32>
      %48 = vector.broadcast %arg6 : f32 to vector<8x2xf32>
      %49 = arith.subf %4, %48 : vector<8x2xf32>
      %50 = arith.mulf %49, %49 : vector<8x2xf32>
      %51 = arith.addf %47, %50 : vector<8x2xf32>
      %52 = vector.broadcast %arg7 : f32 to vector<8x2xf32>
      %53 = arith.subf %5, %52 : vector<8x2xf32>
      %54 = arith.mulf %53, %53 : vector<8x2xf32>
      %55 = arith.addf %51, %54 : vector<8x2xf32>
      %56 = arith.minimumf %arg8, %55 : vector<8x2xf32>
      %57 = tpu.bitcast %56 : vector<8x2xf32> -> vector<8x2xi32>
      %c-16_i32 = arith.constant -16 : i32
      %58 = vector.broadcast %c-16_i32 : i32 to vector<8x2xi32>
      %59 = arith.andi %57, %58 : vector<8x2xi32>
      %60 = arith.ori %59, %10 : vector<8x2xi32>
      %61 = vector.shape_cast %60 : vector<8x2xi32> to vector<1x8x2xi32>
      %cst_15 = arith.constant dense<-2147483648> : vector<1xi32>
      %62 = vector.multi_reduction <maxsi>, %61, %cst_15 [1, 2] : vector<1x8x2xi32> to vector<1xi32>
      %63 = vector.shape_cast %62 : vector<1xi32> to vector<1x1x1xi32>
      %64 = vector.extract %63[0, 0, 0] : i32 from vector<1x1x1xi32>
      %c15_i32 = arith.constant 15 : i32
      %65 = arith.andi %64, %c15_i32 : i32
      %66 = arith.addi %0, %65 : i32
      %67 = arith.index_cast %66 : i32 to index
      %68 = memref.load %arg2[%67] : memref<96xf32, #tpu.memory_space<smem>>
      %c16_i32_16 = arith.constant 16 : i32
      %69 = arith.addi %0, %c16_i32_16 : i32
      %70 = arith.addi %69, %65 : i32
      %71 = arith.index_cast %70 : i32 to index
      %72 = memref.load %arg2[%71] : memref<96xf32, #tpu.memory_space<smem>>
      %c32_i32_17 = arith.constant 32 : i32
      %73 = arith.addi %0, %c32_i32_17 : i32
      %74 = arith.addi %73, %65 : i32
      %75 = arith.index_cast %74 : i32 to index
      %76 = memref.load %arg2[%75] : memref<96xf32, #tpu.memory_space<smem>>
      %77 = vector.broadcast %arg4 : i32 to vector<1x4xi32>
      %78 = arith.cmpi eq, %11, %77 : vector<1x4xi32>
      %79 = vector.broadcast %68 : f32 to vector<1x4xf32>
      %80 = arith.select %78, %79, %arg9 : vector<1x4xi1>, vector<1x4xf32>
      %81 = vector.broadcast %72 : f32 to vector<1x4xf32>
      %82 = arith.select %78, %81, %arg10 : vector<1x4xi1>, vector<1x4xf32>
      %83 = vector.broadcast %76 : f32 to vector<1x4xf32>
      %84 = arith.select %78, %83, %arg11 : vector<1x4xi1>, vector<1x4xf32>
      scf.yield %68, %72, %76, %56, %80, %82, %84 : f32, f32, f32, vector<8x2xf32>, vector<1x4xf32>, vector<1x4xf32>, vector<1x4xf32>
    }
    %c3_i32_11 = arith.constant 3 : i32
    %41 = tpu.concatenate %40#4, %40#5, %40#6 in 0 : vector<1x4xf32>, vector<1x4xf32>, vector<1x4xf32> -> vector<3x4xf32>
    %c0_12 = arith.constant 0 : index
    %c0_13 = arith.constant 0 : index
    %c0_14 = arith.constant 0 : index
    %42 = vector.load %arg3[%c0_12, %c0_13, %c0_14] : memref<1x3x4xf32, #tpu.memory_space<vmem>>, vector<1x3x4xf32>
    %43 = vector.shape_cast %42 : vector<1x3x4xf32> to vector<3x4xf32>
    %44 = vector.shape_cast %41 : vector<3x4xf32> to vector<1x3x4xf32>
    tpu.vector_store %arg3[%c0_12, %c0_13, %c0_14], %44 {strides = array<i32>} : memref<1x3x4xf32, #tpu.memory_space<vmem>>, vector<1x3x4xf32>,
    return
  }
  func.func @transform_0(%arg0: i32) -> (i32, i32, i32) {
    %c0_i32 = arith.constant 0 : i32
    %c0_i32_0 = arith.constant 0 : i32
    %c0_i32_1 = arith.constant 0 : i32
    return %arg0, %c0_i32, %c0_i32_0 : i32, i32, i32
  }
  func.func @transform_1(%arg0: i32) -> i32 {
    %c0_i32 = arith.constant 0 : i32
    %c0_i32_0 = arith.constant 0 : i32
    return %c0_i32 : i32
  }
  func.func @transform_2(%arg0: i32) -> (i32, i32, i32) {
    %c0_i32 = arith.constant 0 : i32
    %c0_i32_0 = arith.constant 0 : i32
    %c0_i32_1 = arith.constant 0 : i32
    return %arg0, %c0_i32, %c0_i32_0 : i32, i32, i32
  }
}

</mosaic_0001>

<llo_original>
// kernel: sparse_group_pallas.2
$region0: #{sparse_group_pallas.2}
  #allocation0 [shape = 'u32[]', space=smem, size = 0x4, offset = 0x4, fixed_abs, tag = 'smem constant byte address 0x4 - core index']
  #allocation1 [shape = 'u32[144,128]{1,0:T(1,128)}', space=vmem, size = 0x12000, scoped, tag = 'internal scratch']
  %s0 = inlined_call_operand.vmem [shape: f32[2,24,2], index: 0, kind: input, shape index: {}]
  %s1 = inlined_call_operand.vmem [shape: f32[96], index: 1, kind: input, shape index: {}]
  %s2 = inlined_call_operand.vmem [shape: f32[2,3,4], index: 2, kind: output, shape index: {}]
  %s3 = sld [smem:[#allocation0]]
  $region52: #{sparse_group_pallas.2} parent=0
    _
  %s5 = ssub.s32 1, %s3
  %s6 = scalar_select 0, %s5, %s3
  $region1: #{sparse_group_pallas.2} parent=0
    #allocation2 [shape = 'u8[512]{0}', space=smem, size = 0x200, scoped, tag = 'input window, operand 1, single buffered']
    #allocation3 [shape = 's32[2]{0}', space=sflag, size = 0x8, scoped, tag = 'scoped memory for sparse_group_pallas.2']
    %7 = vsyncpa [#allocation3], 0
    loop: start=0, step=1, limit=4
    $region2: #{sparse_group_pallas.2} parent=1 // loop_pre_header
      _
    $region3: #{sparse_group_pallas.2} parent=1 // loop_header
      %s9 = sphi 0, %s13
      %p10 = scmp.ge.s32.totalorder %s9, 4
      %s19 = sphi 0, %s21
      %s22 = sphi 0, %s19
      %s23 = sphi 0, %s22
      %s39 = sphi 0, %s23
      %s43 = sphi 0, %s43
      %s45 = sphi 0, %s43
      %s46 = sphi 0, %s45
      %s60 = sphi 0, %s46
      %s66 = sphi 0, %s68
      %s69 = sphi 0, %s66
      %s70 = sphi 0, %s69
      %s86 = sphi 0, %s70
    $region4: #{sparse_group_pallas.2} parent=1 // loop_header_branch
      %12 = sbr.rel (%p10) target = $region8
    $region5: #{sparse_group_pallas.2} parent=1 // loop_body
      %s14 = ssub.s32 %s9, 1
      %s15 = ssub.s32 %s9, 2
      %s16 = sadd.s32 %s9, 1
      %s17 = ssub.s32 %s9, %s16
      %p18 = scmp.eq.s32.totalorder %s17, 0
      %s20 = sadd.s32 %s19, 1
      %s21 = scalar_select %p18, %s19, %s20
      %p24 = pneg %p18
      %p25 = scmp.eq.s32.totalorder %s9, 1
      %p26 = por %p24, %p25
      %p27 = scmp.ne.s32.totalorder %s19, %s22
      %p28 = scmp.eq.s32.totalorder %s9, 0
      %p29 = por %p27, %p28
      %p30 = scmp.ne.s32.totalorder %s19, %s22
      %p31 = scmp.eq.s32.totalorder %s14, 1
      %p32 = por %p30, %p31
      %p33 = scmp.ne.s32.totalorder %s22, %s23
      %p34 = scmp.eq.s32.totalorder %s14, 0
      %p35 = por %p33, %p34
      %p36 = scmp.ne.s32.totalorder %s22, %s23
      %p37 = scmp.eq.s32.totalorder %s15, 1
      %p38 = por %p36, %p37
      %p40 = scmp.ne.s32.totalorder %s23, %s39
      %p41 = scmp.eq.s32.totalorder %s15, 0
      %p42 = por %p40, %p41
      %s44 = sadd.s32 %s43, 1
      %p47 = scmp.eq.s32.totalorder %s9, 1
      %p48 = scmp.ne.s32.totalorder %s43, %s45
      %p49 = scmp.eq.s32.totalorder %s9, 0
      %p50 = por %p48, %p49
      %p51 = scmp.ne.s32.totalorder %s43, %s45
      %p52 = scmp.eq.s32.totalorder %s14, 1
      %p53 = por %p51, %p52
      %p54 = scmp.ne.s32.totalorder %s45, %s46
      %p55 = scmp.eq.s32.totalorder %s14, 0
      %p56 = por %p54, %p55
      %p57 = scmp.ne.s32.totalorder %s45, %s46
      %p58 = scmp.eq.s32.totalorder %s15, 1
      %p59 = por %p57, %p58
      %p61 = scmp.ne.s32.totalorder %s46, %s60
      %p62 = scmp.eq.s32.totalorder %s15, 0
      %p63 = por %p61, %p62
      %s64 = ssub.s32 %s9, %s16
      %p65 = scmp.eq.s32.totalorder %s64, 0
      %s67 = sadd.s32 %s66, 1
      %s68 = scalar_select %p65, %s66, %s67
      %p71 = pneg %p65
      %p72 = scmp.eq.s32.totalorder %s9, 1
      %p73 = por %p71, %p72
      %p74 = scmp.ne.s32.totalorder %s66, %s69
      %p75 = scmp.eq.s32.totalorder %s9, 0
      %p76 = por %p74, %p75
      %p77 = scmp.ne.s32.totalorder %s66, %s69
      %p78 = scmp.eq.s32.totalorder %s14, 1
      %p79 = por %p77, %p78
      %p80 = scmp.ne.s32.totalorder %s69, %s70
      %p81 = scmp.eq.s32.totalorder %s14, 0
      %p82 = por %p80, %p81
      %p83 = scmp.ne.s32.totalorder %s69, %s70
      %p84 = scmp.eq.s32.totalorder %s15, 1
      %p85 = por %p83, %p84
      %p87 = scmp.ne.s32.totalorder %s70, %s86
      %p88 = scmp.eq.s32.totalorder %s15, 0
      %p89 = por %p87, %p88
      %p90 = scmp.le.s32.totalorder 1, %s9
      %p91 = scmp.lt.s32.totalorder %s9, 3
      %p92 = pnand %p90, %p91
      %p93 = pneg %p92
      // Predicated region
      $region9: #{sparse_group_pallas.2} parent=5 // pred_check
        _
      $region10: #{sparse_group_pallas.2} parent=5 // pred_check_branch
        %95 = sbr.rel (%p92) target = $region12
      $region11: #{sparse_group_pallas.2} parent=5 // pred_region
        %s96 = ssub.s32 %s9, 1
        // Predicated region
        $region13: #{sparse_group_pallas.2} parent=11 // pred_check
          %p97 = pneg %p56
        $region14: #{sparse_group_pallas.2} parent=11 // pred_check_branch
          %99 = sbr.rel (%p97) target = $region16
        $region15: #{sparse_group_pallas.2} parent=11 // pred_region
          %s101 = ssub.s32 16, 16
          %102 = vsyncadd [#allocation3], %s101
          %s104 = sshll.u32 %s1, 4
          %s105 = int_to_ptr.vmem [resolvable:$true] %s104
          %107 = dma.vmem_to_smem %s105, 16, [#allocation2], [#allocation3]
        $region16: #{sparse_group_pallas.2} parent=11 // pred_fallthru
          _
      $region12: #{sparse_group_pallas.2} parent=5 // pred_fallthru
        _
      %p108 = scmp.lt.s32.totalorder %s9, 2
      // Predicated region
      $region17: #{sparse_group_pallas.2} parent=5 // pred_check
        %p109 = pneg %p108
      $region18: #{sparse_group_pallas.2} parent=5 // pred_check_branch
        %111 = sbr.rel (%p109) target = $region20
      $region19: #{sparse_group_pallas.2} parent=5 // pred_region
        // Predicated region
        $region21: #{sparse_group_pallas.2} parent=19 // pred_check
          %p112 = pneg %p29
        $region22: #{sparse_group_pallas.2} parent=19 // pred_check_branch
          %114 = sbr.rel (%p112) target = $region24
        $region23: #{sparse_group_pallas.2} parent=19 // pred_region
          %p115 = scmp.lt.s32.totalorder %s9, 1
          %s116 = scalar_select %p115, %s9, 1
          %s117 = smul.addr %s116, 3
          %s118 = smul.addr %s117, 8
          %s119 = scalar_lea.vmem %s0, %s118
        $region24: #{sparse_group_pallas.2} parent=19 // pred_fallthru
          _
      $region20: #{sparse_group_pallas.2} parent=5 // pred_fallthru
        _
      %p120 = scmp.le.s32.totalorder 1, %s9
      %p121 = scmp.lt.s32.totalorder %s9, 3
      %p122 = pnand %p120, %p121
      %p123 = pneg %p122
      // Predicated region
      $region25: #{sparse_group_pallas.2} parent=5 // pred_check
        _
      $region26: #{sparse_group_pallas.2} parent=5 // pred_check_branch
        %125 = sbr.rel (%p122) target = $region28
      $region27: #{sparse_group_pallas.2} parent=5 // pred_region
        %s126 = ssub.s32 %s9, 1
        // Predicated region
        $region29: #{sparse_group_pallas.2} parent=27 // pred_check
          %p127 = pneg %p56
        $region30: #{sparse_group_pallas.2} parent=27 // pred_check_branch
          %129 = sbr.rel (%p127) target = $region32
        $region31: #{sparse_group_pallas.2} parent=27 // pred_region
          %130 = dma.done [#allocation3], 16
        $region32: #{sparse_group_pallas.2} parent=27 // pred_fallthru
          _
        %131 = sfence
        %p132 = scmp.lt.s32.totalorder %s14, 1
        %s133 = scalar_select %p132, %s14, 1
        %s134 = smul.addr %s133, 3
        %s135 = smul.addr %s134, 8
        %s136 = scalar_lea.vmem %s0, %s135
        %p137 = pneg %p35
        %p138 = pneg %p32
        %p139 = pneg %p56
        %p140 = pneg %p53
        %p141 = pneg %p82
        %p142 = pneg %p79
        %p143 = scmp.lt.s32.totalorder %s14, 1
        %s144 = scalar_select %p143, %s14, 1
        %s145 = smul.addr %s144, 4
        %s146 = scalar_lea.vmem %s2, %s145
        %p147 = scmp.lt.s32.totalorder %s14, 1
        %s148 = scalar_select %p147, %s14, 1
        %s149 = smul.addr %s148, 3
        %s150 = smul.addr %s149, 8
        %s151 = scalar_lea.vmem %s0, %s150
        %p152 = scmp.lt.s32.totalorder %s14, 1
        %s153 = scalar_select %p152, %s14, 1
        %s154 = smul.addr %s153, 4
        %s155 = scalar_lea.vmem %s2, %s154
        %s156 = smul.u32 %s14, 48
        %v157 = vld [vmem:[%s151] sm:$0xff]
        %v158 = vld [vmem:[%s151 + $0x8] sm:$0xff]
        %v159 = vld [vmem:[%s151 + $0x10] sm:$0xff]
        %v160 = vlaneseq
        %v161 = vshrl.u32 %v160, 7
        %v162 = vmul.u32 %v161, 2
        %v163 = vlaneseq
        %v164 = vand.u32 %v163, 127
        %v165 = vadd.s32 %v162, %v164
        %s166 = sld [smem:[#allocation2 + %s156]]
        %s167 = sadd.s32 %s156, 16
        %s168 = sld [smem:[#allocation2 + %s167]]
        %s169 = sadd.s32 %s156, 32
        %s170 = sld [smem:[#allocation2 + %s169]]
        %vm171 = vcmp.eq.s32.totalorder %v164, 0
        %v172 = vstv %s166
        %v173 = vsel %vm171, %v172, 0.0
        %v174 = vstv %s168
        %v175 = vsel %vm171, %v174, 0.0
        %v176 = vstv %s170
        %v177 = vsel %vm171, %v176, 0.0
        loop: start=1, step=1, limit=4
        $region33: #{sparse_group_pallas.2} parent=27 // loop_pre_header
          _
        $region34: #{sparse_group_pallas.2} parent=27 // loop_header
          %s179 = sphi 1, %s183
          %p180 = scmp.ge.s32.totalorder %s179, 4
          %s184 = sphi %s166, %s234
          %s185 = sphi %s168, %s236
          %s186 = sphi %s170, %s238
          %v187 = vphi 1e+10, %v202
          %v188 = vphi %v173, %v242
          %v189 = vphi %v175, %v244
          %v190 = vphi %v177, %v246
        $region35: #{sparse_group_pallas.2} parent=27 // loop_header_branch
          %182 = sbr.rel (%p180) target = $region39
        $region36: #{sparse_group_pallas.2} parent=27 // loop_body
          %v191 = vstv %s184
          %v192 = vsub.f32 %v157, %v191
          %v193 = vmul.f32 %v192, %v192
          %v194 = vstv %s185
          %v195 = vsub.f32 %v158, %v194
          %v196 = vmul.f32 %v195, %v195
          %v197 = vadd.f32 %v193, %v196
          %v198 = vstv %s186
          %v199 = vsub.f32 %v159, %v198
          %v200 = vmul.f32 %v199, %v199
          %v201 = vadd.f32 %v197, %v200
          %v202 = vmin.f32 %v187, %v201
          %v204 = vand.u32 %v202, 4294967280
          %v205 = vor.u32 %v204, %v165
          %vm206 = vcmask 15360
          %v207 = vsel %vm206, %v205, 2147483648
          %v208 = vand.u32 %v207, 65535
          %v209 = vshra.s32 %v207, 16
          %v210 = vcvt.s32.f32 %v208
          %v211 = vcvt.s32.f32 %v209
          %212 = vmax.xlane.f32.xlu0 %v211
          %v213 = vpop.xlane.xlu0 %212
          %vm214 = vcmp.eq.f32.partialorder %v211, %v213
          %v215 = vsel %vm214, %v210, -inf
          %216 = vmax.xlane.f32.xlu0 %v215
          %v217 = vpop.xlane.xlu0 %216
          %v218 = vcvt.f32.s32 %v217
          %v219 = vcvt.f32.s32 %v213
          %v220 = vshll.u32 %v219, 16
          %v221 = vadd.s32 %v220, %v218
          %v222 = vrot.slane %v221, 4
          %vm223 = vcmp.gt.s32.totalorder %v221, %v222
          %v224 = vsel %vm223, %v221, %v222
          %v225 = vrot.slane %v224, 2
          %vm226 = vcmp.gt.s32.totalorder %v224, %v225
          %v227 = vsel %vm226, %v224, %v225
          %v228 = vrot.slane %v227, 1
          %vm229 = vcmp.gt.s32.totalorder %v227, %v228
          %v230 = vsel %vm229, %v227, %v228
          %s231 = vtos %v230
          %s232 = sand.u32 %s231, 15
          %s233 = sadd.s32 %s156, %s232
          %s234 = sld [smem:[#allocation2 + %s233]]
          %s235 = sadd.s32 %s167, %s232
          %s236 = sld [smem:[#allocation2 + %s235]]
          %s237 = sadd.s32 %s169, %s232
          %s238 = sld [smem:[#allocation2 + %s237]]
          %v239 = vstv %s179
          %vm240 = vcmp.eq.s32.totalorder %v164, %v239
          %v241 = vstv %s234
          %v242 = vsel %vm240, %v241, %v188
          %v243 = vstv %s236
          %v244 = vsel %vm240, %v243, %v189
          %v245 = vstv %s238
          %v246 = vsel %vm240, %v245, %v190
        $region37: #{sparse_group_pallas.2} parent=27 // loop_footer
          %s183 = sadd.s32 1, %s179
        $region38: #{sparse_group_pallas.2} parent=27 // loop_footer_branch
          %178 = sbr.rel target = $region34
        $region39: #{sparse_group_pallas.2} parent=27 // loop_exit
          _
        %vm247 = vcmask 1040384
        %v248 = vsel %vm247, %v188, %v189
        %vm249 = vcmask 1041408
        %v250 = vsel %vm249, %v248, %v190
        %vm251 = vcmask 26624
        %252 = vst.msk [vmem:[%s155] sm:$0x7] %vm251, %v250
        %p253 = scmp.lt.s32.totalorder %s14, 1
        %s254 = scalar_select %p253, %s14, 1
        %s255 = smul.addr %s254, 4
        %s256 = scalar_lea.vmem %s2, %s255
        // Predicated region
        $region40: #{sparse_group_pallas.2} parent=27 // pred_check
          %p257 = pneg %p79
        $region41: #{sparse_group_pallas.2} parent=27 // pred_check_branch
          %259 = sbr.rel (%p257) target = $region43
        $region42: #{sparse_group_pallas.2} parent=27 // pred_region
          _
        $region43: #{sparse_group_pallas.2} parent=27 // pred_fallthru
          _
      $region28: #{sparse_group_pallas.2} parent=5 // pred_fallthru
        _
      %p260 = scmp.le.s32.totalorder 2, %s9
      // Predicated region
      $region44: #{sparse_group_pallas.2} parent=5 // pred_check
        %p261 = pneg %p260
      $region45: #{sparse_group_pallas.2} parent=5 // pred_check_branch
        %263 = sbr.rel (%p261) target = $region47
      $region46: #{sparse_group_pallas.2} parent=5 // pred_region
        %s264 = ssub.s32 %s9, 2
        // Predicated region
        $region48: #{sparse_group_pallas.2} parent=46 // pred_check
          %p265 = pneg %p85
        $region49: #{sparse_group_pallas.2} parent=46 // pred_check_branch
          %267 = sbr.rel (%p265) target = $region51
        $region50: #{sparse_group_pallas.2} parent=46 // pred_region
          %p268 = scmp.lt.s32.totalorder %s15, 1
          %s269 = scalar_select %p268, %s15, 1
          %s270 = smul.addr %s269, 4
          %s271 = scalar_lea.vmem %s2, %s270
        $region51: #{sparse_group_pallas.2} parent=46 // pred_fallthru
          _
      $region47: #{sparse_group_pallas.2} parent=5 // pred_fallthru
        _
    $region6: #{sparse_group_pallas.2} parent=1 // loop_footer
      %s13 = sadd.s32 1, %s9
    $region7: #{sparse_group_pallas.2} parent=1 // loop_footer_branch
      %8 = sbr.rel target = $region3
    $region8: #{sparse_group_pallas.2} parent=1 // loop_exit
      _
    %272 = vsyncpa [#allocation3], 1
    %s273 = scalar_lea.sflag [#allocation3], 1
    %274 = vsyncpa %s273, 1

// kernel: sparse_group_pallas.3
$region0: #{sparse_group_pallas.3}
  #allocation0 [shape = 'u32[]', space=smem, size = 0x4, offset = 0x4, fixed_abs, tag = 'smem constant byte address 0x4 - core index']
  #allocation1 [shape = 'u32[144,128]{1,0:T(1,128)}', space=vmem, size = 0x12000, scoped, tag = 'internal scratch']
  %s0 = inlined_call_operand.vmem [shape: f32[2,16,3], index: 0, kind: input, shape index: {}]
  %s1 = inlined_call_operand.vmem [shape: f32[2,3,4], index: 1, kind: input, shape index: {}]
  %s2 = inlined_call_operand.vmem [shape: s32[2,8,4], index: 2, kind: output, shape index: {}]
  %s3 = sld [smem:[#allocation0]]
  $region48: #{sparse_group_pallas.3} parent=0
    _
  %s5 = ssub.s32 1, %s3
  %s6 = scalar_select 0, %s5, %s3
  loop: start=0, step=1, limit=4
  $region2: #{sparse_group_pallas.3} parent=0 // loop_pre_header
    _
  $region3: #{sparse_group_pallas.3} parent=0 // loop_header
    %s8 = sphi 0, %s12
    %p9 = scmp.ge.s32.totalorder %s8, 4
    %s15 = sphi 0, %s27
    %s16 = sphi 0, %s23
    %s17 = sphi 0, %s15
    %s18 = sphi 0, %s16
    %s19 = sphi 0, %s17
    %s20 = sphi 0, %s18
    %s30 = sphi 0, %s32
    %s33 = sphi 0, %s30
    %s34 = sphi 0, %s33
    %s50 = sphi 0, %s34
    %s58 = sphi 0, %s60
    %s61 = sphi 0, %s58
    %s62 = sphi 0, %s61
    %s78 = sphi 0, %s62
    %s86 = sphi 0, %s88
    %s89 = sphi 0, %s86
    %s90 = sphi 0, %s89
    %s106 = sphi 0, %s90
  $region4: #{sparse_group_pallas.3} parent=0 // loop_header_branch
    %11 = sbr.rel (%p9) target = $region8
  $region5: #{sparse_group_pallas.3} parent=0 // loop_body
    %s13 = ssub.s32 %s8, 1
    %s14 = ssub.s32 %s8, 2
    %s21 = sadd.s32 1, %s16
    %p22 = scmp.ge.s32.totalorder %s21, 1
    %s23 = scalar_select %p22, 0, %s21
    %s24 = sadd.s32 1, %s15
    %s25 = scalar_select %p22, %s24, %s15
    %p26 = scmp.ge.s32.totalorder %s25, 2
    %s27 = scalar_select %p26, 0, %s25
    %s28 = ssub.s32 %s15, %s27
    %p29 = scmp.eq.s32.totalorder %s28, 0
    %s31 = sadd.s32 %s30, 1
    %s32 = scalar_select %p29, %s30, %s31
    %p35 = pneg %p29
    %p36 = scmp.eq.s32.totalorder %s8, 1
    %p37 = por %p35, %p36
    %p38 = scmp.ne.s32.totalorder %s30, %s33
    %p39 = scmp.eq.s32.totalorder %s8, 0
    %p40 = por %p38, %p39
    %p41 = scmp.ne.s32.totalorder %s30, %s33
    %p42 = scmp.eq.s32.totalorder %s13, 1
    %p43 = por %p41, %p42
    %p44 = scmp.ne.s32.totalorder %s33, %s34
    %p45 = scmp.eq.s32.totalorder %s13, 0
    %p46 = por %p44, %p45
    %p47 = scmp.ne.s32.totalorder %s33, %s34
    %p48 = scmp.eq.s32.totalorder %s14, 1
    %p49 = por %p47, %p48
    %p51 = scmp.ne.s32.totalorder %s34, %s50
    %p52 = scmp.eq.s32.totalorder %s14, 0
    %p53 = por %p51, %p52
    %s54 = ssub.s32 %s15, %s27
    %s55 = ssub.s32 %s16, %s23
    %s56 = sor.u32 %s54, %s55
    %p57 = scmp.eq.s32.totalorder %s56, 0
    %s59 = sadd.s32 %s58, 1
    %s60 = scalar_select %p57, %s58, %s59
    %p63 = pneg %p57
    %p64 = scmp.eq.s32.totalorder %s8, 1
    %p65 = por %p63, %p64
    %p66 = scmp.ne.s32.totalorder %s58, %s61
    %p67 = scmp.eq.s32.totalorder %s8, 0
    %p68 = por %p66, %p67
    %p69 = scmp.ne.s32.totalorder %s58, %s61
    %p70 = scmp.eq.s32.totalorder %s13, 1
    %p71 = por %p69, %p70
    %p72 = scmp.ne.s32.totalorder %s61, %s62
    %p73 = scmp.eq.s32.totalorder %s13, 0
    %p74 = por %p72, %p73
    %p75 = scmp.ne.s32.totalorder %s61, %s62
    %p76 = scmp.eq.s32.totalorder %s14, 1
    %p77 = por %p75, %p76
    %p79 = scmp.ne.s32.totalorder %s62, %s78
    %p80 = scmp.eq.s32.totalorder %s14, 0
    %p81 = por %p79, %p80
    %s82 = ssub.s32 %s15, %s27
    %s83 = ssub.s32 %s16, %s23
    %s84 = sor.u32 %s82, %s83
    %p85 = scmp.eq.s32.totalorder %s84, 0
    %s87 = sadd.s32 %s86, 1
    %s88 = scalar_select %p85, %s86, %s87
    %p91 = pneg %p85
    %p92 = scmp.eq.s32.totalorder %s8, 1
    %p93 = por %p91, %p92
    %p94 = scmp.ne.s32.totalorder %s86, %s89
    %p95 = scmp.eq.s32.totalorder %s8, 0
    %p96 = por %p94, %p95
    %p97 = scmp.ne.s32.totalorder %s86, %s89
    %p98 = scmp.eq.s32.totalorder %s13, 1
    %p99 = por %p97, %p98
    %p100 = scmp.ne.s32.totalorder %s89, %s90
    %p101 = scmp.eq.s32.totalorder %s13, 0
    %p102 = por %p100, %p101
    %p103 = scmp.ne.s32.totalorder %s89, %s90
    %p104 = scmp.eq.s32.totalorder %s14, 1
    %p105 = por %p103, %p104
    %p107 = scmp.ne.s32.totalorder %s90, %s106
    %p108 = scmp.eq.s32.totalorder %s14, 0
    %p109 = por %p107, %p108
    %p110 = scmp.le.s32.totalorder 1, %s8
    %p111 = scmp.lt.s32.totalorder %s8, 3
    %p112 = pnand %p110, %p111
    %p113 = pneg %p112
    // Predicated region
    $region9: #{sparse_group_pallas.3} parent=5 // pred_check
      _
    $region10: #{sparse_group_pallas.3} parent=5 // pred_check_branch
      %115 = sbr.rel (%p112) target = $region12
    $region11: #{sparse_group_pallas.3} parent=5 // pred_region
      %s116 = ssub.s32 %s8, 1
    $region12: #{sparse_group_pallas.3} parent=5 // pred_fallthru
      _
    %p117 = scmp.lt.s32.totalorder %s8, 2
    // Predicated region
    $region13: #{sparse_group_pallas.3} parent=5 // pred_check
      %p118 = pneg %p117
    $region14: #{sparse_group_pallas.3} parent=5 // pred_check_branch
      %120 = sbr.rel (%p118) target = $region16
    $region15: #{sparse_group_pallas.3} parent=5 // pred_region
      // Predicated region
      $region17: #{sparse_group_pallas.3} parent=15 // pred_check
        %p121 = pneg %p40
      $region18: #{sparse_group_pallas.3} parent=15 // pred_check_branch
        %123 = sbr.rel (%p121) target = $region20
      $region19: #{sparse_group_pallas.3} parent=15 // pred_region
        %p124 = scmp.lt.s32.totalorder %s15, 1
        %s125 = scalar_select %p124, %s15, 1
        %s126 = smul.addr %s125, 2
        %s127 = smul.addr %s126, 8
        %s128 = scalar_lea.vmem %s0, %s127
      $region20: #{sparse_group_pallas.3} parent=15 // pred_fallthru
        _
      // Predicated region
      $region21: #{sparse_group_pallas.3} parent=15 // pred_check
        %p129 = pneg %p68
      $region22: #{sparse_group_pallas.3} parent=15 // pred_check_branch
        %131 = sbr.rel (%p129) target = $region24
      $region23: #{sparse_group_pallas.3} parent=15 // pred_region
        %p132 = scmp.lt.s32.totalorder %s15, 1
        %s133 = scalar_select %p132, %s15, 1
        %p134 = scmp.lt.s32.totalorder %s16, 0
        %s135 = scalar_select %p134, %s16, 0
        %s136 = sadd.s32 %s135, %s133
        %s137 = smul.addr %s136, 4
        %s138 = scalar_lea.vmem %s1, %s137
      $region24: #{sparse_group_pallas.3} parent=15 // pred_fallthru
        _
    $region16: #{sparse_group_pallas.3} parent=5 // pred_fallthru
      _
    %p139 = scmp.le.s32.totalorder 1, %s8
    %p140 = scmp.lt.s32.totalorder %s8, 3
    %p141 = pnand %p139, %p140
    %p142 = pneg %p141
    // Predicated region
    $region25: #{sparse_group_pallas.3} parent=5 // pred_check
      _
    $region26: #{sparse_group_pallas.3} parent=5 // pred_check_branch
      %144 = sbr.rel (%p141) target = $region28
    $region27: #{sparse_group_pallas.3} parent=5 // pred_region
      %s145 = ssub.s32 %s8, 1
      %p146 = scmp.lt.s32.totalorder %s17, 1
      %s147 = scalar_select %p146, %s17, 1
      %s148 = smul.addr %s147, 2
      %s149 = smul.addr %s148, 8
      %s150 = scalar_lea.vmem %s0, %s149
      %p151 = pneg %p46
      %p152 = pneg %p43
      %p153 = scmp.lt.s32.totalorder %s17, 1
      %s154 = scalar_select %p153, %s17, 1
      %p155 = scmp.lt.s32.totalorder %s18, 0
      %s156 = scalar_select %p155, %s18, 0
      %s157 = sadd.s32 %s156, %s154
      %s158 = smul.addr %s157, 4
      %s159 = scalar_lea.vmem %s1, %s158
      %p160 = pneg %p74
      %p161 = pneg %p71
      %p162 = pneg %p102
      %p163 = pneg %p99
      %p164 = scmp.lt.s32.totalorder %s17, 1
      %s165 = scalar_select %p164, %s17, 1
      %p166 = scmp.lt.s32.totalorder %s18, 0
      %s167 = scalar_select %p166, %s18, 0
      %s168 = sadd.s32 %s167, %s165
      %s169 = smul.addr %s168, 8
      %s170 = scalar_lea.vmem %s2, %s169
      %p171 = scmp.lt.s32.totalorder %s17, 1
      %s172 = scalar_select %p171, %s17, 1
      %s173 = smul.addr %s172, 2
      %s174 = smul.addr %s173, 8
      %s175 = scalar_lea.vmem %s0, %s174
      %p176 = scmp.lt.s32.totalorder %s17, 1
      %s177 = scalar_select %p176, %s17, 1
      %p178 = scmp.lt.s32.totalorder %s18, 0
      %s179 = scalar_select %p178, %s18, 0
      %s180 = sadd.s32 %s179, %s177
      %s181 = smul.addr %s180, 4
      %s182 = scalar_lea.vmem %s1, %s181
      %p183 = scmp.lt.s32.totalorder %s17, 1
      %s184 = scalar_select %p183, %s17, 1
      %p185 = scmp.lt.s32.totalorder %s18, 0
      %s186 = scalar_select %p185, %s18, 0
      %s187 = sadd.s32 %s186, %s184
      %s188 = smul.addr %s187, 8
      %s189 = scalar_lea.vmem %s2, %s188
      %v190 = vld [vmem:[%s175] sm:$0xff]
      %v191 = vld [vmem:[%s175 + $0x8] sm:$0xff]
      %v192 = vld [vmem:[%s182] sm:$0x7]
      %194 = vset.pattern.permute.xlu0 0
      %195 = vperm.xlu0 %194, %v190
      %v196 = vpop.permute.xlu0 %195
      %199 = vset.pattern.permute.xlu0 0
      %200 = vperm.xlu0 %199, %v191
      %v201 = vpop.permute.xlu0 %200
      %v203 = vlaneseq
      %v204 = vshrl.u32 %v203, 7
      %v205 = vsub.s32 0, %v204
      %v206 = vrot.slane %v192, %v205
      %v207 = vsub.f32 %v196, %v206
      %v208 = vsub.f32 %v201, %v206
      %v209 = vmul.f32 %v207, %v207
      %v210 = vmul.f32 %v208, %v208
      %211 = vset.pattern.permute.xlu0 1
      %212 = vperm.xlu0 %211, %v190
      %v213 = vpop.permute.xlu0 %212
      %215 = vset.pattern.permute.xlu0 1
      %216 = vperm.xlu0 %215, %v191
      %v217 = vpop.permute.xlu0 %216
      %v219 = vlaneseq
      %v220 = vshrl.u32 %v219, 7
      %v221 = vsub.s32 1, %v220
      %v222 = vrot.slane %v192, %v221
      %v223 = vsub.f32 %v213, %v222
      %v224 = vsub.f32 %v217, %v222
      %v225 = vmul.f32 %v223, %v223
      %v226 = vmul.f32 %v224, %v224
      %v227 = vadd.f32 %v209, %v225
      %v228 = vadd.f32 %v210, %v226
      %229 = vset.pattern.permute.xlu0 2
      %230 = vperm.xlu0 %229, %v190
      %v231 = vpop.permute.xlu0 %230
      %233 = vset.pattern.permute.xlu0 2
      %234 = vperm.xlu0 %233, %v191
      %v235 = vpop.permute.xlu0 %234
      %v237 = vlaneseq
      %v238 = vshrl.u32 %v237, 7
      %v239 = vsub.s32 2, %v238
      %v240 = vrot.slane %v192, %v239
      %v241 = vsub.f32 %v231, %v240
      %v242 = vsub.f32 %v235, %v240
      %v243 = vmul.f32 %v241, %v241
      %v244 = vmul.f32 %v242, %v242
      %v245 = vadd.f32 %v227, %v243
      %v246 = vadd.f32 %v228, %v244
      %v247 = vlaneseq
      %v248 = vshrl.u32 %v247, 7
      %v249 = vadd.s32 %v248, 8
      %v252 = vand.u32 %v245, 4294967280
      %v253 = vand.u32 %v246, 4294967280
      %v254 = vor.u32 %v252, %v248
      %v255 = vor.u32 %v253, %v249
      loop: start=0, step=1, limit=8
      $region29: #{sparse_group_pallas.3} parent=27 // loop_pre_header
        _
      $region30: #{sparse_group_pallas.3} parent=27 // loop_header
        %s257 = sphi 0, %s261
        %p258 = scmp.ge.s32.totalorder %s257, 8
        %v262 = vphi %v254, %v282
        %v263 = vphi %v255, %v283
        %v264 = vphi 0, %v286
      $region31: #{sparse_group_pallas.3} parent=27 // loop_header_branch
        %260 = sbr.rel (%p258) target = $region35
      $region32: #{sparse_group_pallas.3} parent=27 // loop_body
        %vm265 = vcmask 31744
        %v266 = vsel %vm265, %v262, 2147483647
        %v267 = vsel %vm265, %v263, 2147483647
        %vm268 = vcmp.lt.s32.totalorder %v266, %v267
        %v269 = vsel %vm268, %v266, %v267
        %v270 = vrot.slane %v269, 4
        %vm271 = vcmp.lt.s32.totalorder %v269, %v270
        %v272 = vsel %vm271, %v269, %v270
        %v273 = vrot.slane %v272, 2
        %vm274 = vcmp.lt.s32.totalorder %v272, %v273
        %v275 = vsel %vm274, %v272, %v273
        %v276 = vrot.slane %v275, 1
        %vm277 = vcmp.lt.s32.totalorder %v275, %v276
        %v278 = vsel %vm277, %v275, %v276
        %v279 = vand.u32 %v278, 15
        %vm280 = vcmp.eq.s32.totalorder %v248, %v279
        %vm281 = vcmp.eq.s32.totalorder %v249, %v279
        %v282 = vsel %vm280, 2147483647, %v262
        %v283 = vsel %vm281, 2147483647, %v263
        %v284 = vstv %s257
        %vm285 = vcmp.eq.s32.totalorder %v248, %v284
        %v286 = vsel %vm285, %v279, %v264
      $region33: #{sparse_group_pallas.3} parent=27 // loop_footer
        %s261 = sadd.s32 1, %s257
      $region34: #{sparse_group_pallas.3} parent=27 // loop_footer_branch
        %256 = sbr.rel target = $region30
      $region35: #{sparse_group_pallas.3} parent=27 // loop_exit
        _
      %vm287 = vcmask 31744
      %288 = vst.msk [vmem:[%s189] sm:$0xff] %vm287, %v264
      %p289 = scmp.lt.s32.totalorder %s17, 1
      %s290 = scalar_select %p289, %s17, 1
      %p291 = scmp.lt.s32.totalorder %s18, 0
      %s292 = scalar_select %p291, %s18, 0
      %s293 = sadd.s32 %s292, %s290
      %s294 = smul.addr %s293, 8
      %s295 = scalar_lea.vmem %s2, %s294
      // Predicated region
      $region36: #{sparse_group_pallas.3} parent=27 // pred_check
        %p296 = pneg %p99
      $region37: #{sparse_group_pallas.3} parent=27 // pred_check_branch
        %298 = sbr.rel (%p296) target = $region39
      $region38: #{sparse_group_pallas.3} parent=27 // pred_region
        _
      $region39: #{sparse_group_pallas.3} parent=27 // pred_fallthru
        _
    $region28: #{sparse_group_pallas.3} parent=5 // pred_fallthru
      _
    %p299 = scmp.le.s32.totalorder 2, %s8
    // Predicated region
    $region40: #{sparse_group_pallas.3} parent=5 // pred_check
      %p300 = pneg %p299
    $region41: #{sparse_group_pallas.3} parent=5 // pred_check_branch
      %302 = sbr.rel (%p300) target = $region43
    $region42: #{sparse_group_pallas.3} parent=5 // pred_region
      %s303 = ssub.s32 %s8, 2
      // Predicated region
      $region44: #{sparse_group_pallas.3} parent=42 // pred_check
        %p304 = pneg %p105
      $region45: #{sparse_group_pallas.3} parent=42 // pred_check_branch
        %306 = sbr.rel (%p304) target = $region47
      $region46: #{sparse_group_pallas.3} parent=42 // pred_region
        %p307 = scmp.lt.s32.totalorder %s19, 1
        %s308 = scalar_select %p307, %s19, 1
        %p309 = scmp.lt.s32.totalorder %s20, 0
        %s310 = scalar_select %p309, %s20, 0
        %s311 = sadd.s32 %s310, %s308
        %s312 = smul.addr %s311, 8
        %s313 = scalar_lea.vmem %s2, %s312
      $region47: #{sparse_group_pallas.3} parent=42 // pred_fallthru
        _
    $region43: #{sparse_group_pallas.3} parent=5 // pred_fallthru
      _
  $region6: #{sparse_group_pallas.3} parent=0 // loop_footer
    %s12 = sadd.s32 1, %s8
  $region7: #{sparse_group_pallas.3} parent=0 // loop_footer_branch
    %7 = sbr.rel target = $region3
  $region8: #{sparse_group_pallas.3} parent=0 // loop_exit
    _

</llo_original>
